<compile_context>
chip_gen: v7x
topology: tpu7x:2x2x1
jax: 0.10.0
libtpu: 0.0.40
codegen_flags: <defaults>
</compile_context>

<pallas_src>
import functools

import jax
import jax.numpy as jnp
from jax.experimental import pallas as pl
from jax.experimental.pallas import tpu as pltpu

_LANE = 128


def _quantile_loss_kernel(x_ref, t_ref, out_ref, *, quantiles):
    """x_ref: (Q, tr, 128) predictions, t_ref: (tr, 128) targets (native dtype).

    Writes an (8, 128) float32 partial sum for this grid step.
    """
    t = t_ref[...].astype(jnp.float32)               # upcast after the load
    total = jnp.zeros_like(t)
    for i, q in enumerate(quantiles):                # Q is tiny -> unrolled
        q = float(q)
        e = t - x_ref[i].astype(jnp.float32)         # (tr, 128), dense lanes
        total = total + jnp.maximum((q - 1.0) * e, q * e)
    tr, w = total.shape
    # (tr, 128) -> (tr//8, 8, 128) splits only the leading (sublane-major) dim,
    # a free view; reduce to a single (8, 128) tile -> full unmasked store.
    out_ref[...] = jnp.sum(total.reshape(tr // 8, 8, w), axis=0)


def _round_up(x, m):
    return -(-x // m) * m


def _sublane_multiple(*dtypes):
    """Second-to-last block dim multiple: 8 (4-byte), 16 (2-byte), 32 (1-byte)."""
    mult = 8
    for dt in dtypes:
        mult = max(mult, 32 // max(1, jnp.dtype(dt).itemsize))
    return mult


def _choose_block_rows(r, cap, mult):
    """Largest row block <= cap (multiple of `mult`), but ~ceil(r/2) when that
    is smaller so there are >= 2 grid steps (both v7x TensorCores stream).
    On 1-TC chips the extra grid step only costs ~0.35 us, so apply always."""
    cap = max(mult, (cap // mult) * mult)
    if r <= mult:
        return mult
    half = _round_up(_round_up(r, 2) // 2, mult)     # ~ceil(r/2), mult-aligned
    return max(mult, min(cap, half))


def quantile_loss_qn(preds_qn, targets, quantiles, *, block_rows_cap=2048):
    """Quantile loss with predictions in quantile-major (Q, N) layout.

    Preferred entry point: (Q, N) -> (Q, R, 128) is a free row-major reshape,
    so predictions are streamed from HBM exactly once (no transpose pass).
    """
    q_n, n = preds_qn.shape
    assert len(quantiles) == q_n, "quantiles must match predictions' leading dim"
    assert targets.shape == (n,)

    mult = _sublane_multiple(preds_qn.dtype, targets.dtype)
    r = pl.cdiv(n, _LANE)
    block_rows = _choose_block_rows(r, block_rows_cap, mult)
    grid = pl.cdiv(r, block_rows)
    r_padded = grid * block_rows
    n_padded = r_padded * _LANE

    # Zero padding contributes exactly 0 to the loss sum (error = 0 - 0);
    # only the mean divisor (original n) matters.
    if n_padded != n:
        preds_qn = jnp.pad(preds_qn, ((0, 0), (0, n_padded - n)))
        targets = jnp.pad(targets, (0, n_padded - n))

    preds = preds_qn.reshape(q_n, r_padded, _LANE)   # free row-major view
    tgt2d = targets.reshape(r_padded, _LANE)         # free row-major view

    kernel = functools.partial(
        _quantile_loss_kernel,
        quantiles=tuple(float(q) for q in quantiles))

    out_rows = grid * 8
    cost = pl.CostEstimate(
        flops=5 * n_padded * q_n,                    # sub, 2 muls, max, add
        transcendentals=0,
        bytes_accessed=(preds.size * preds.dtype.itemsize
                        + tgt2d.size * tgt2d.dtype.itemsize
                        + out_rows * _LANE * 4),
    )

    partials = pl.pallas_call(
        kernel,
        out_shape=jax.ShapeDtypeStruct((out_rows, _LANE), jnp.float32),
        grid_spec=pltpu.PrefetchScalarGridSpec(
            num_scalar_prefetch=0,
            grid=(grid,),
            in_specs=[
                # (Q, block_rows, 128) prediction tile
                pl.BlockSpec((q_n, block_rows, _LANE), lambda g: (0, g, 0)),
                # (block_rows, 128) target tile
                pl.BlockSpec((block_rows, _LANE), lambda g: (g, 0)),
            ],
            # each grid step owns its own (8, 128) partial-sum block
            out_specs=pl.BlockSpec((8, _LANE), lambda g: (g, 0)),
        ),
        compiler_params=pltpu.CompilerParams(
            dimension_semantics=("parallel",),        # independent partials
            vmem_limit_bytes=32 * 1024 * 1024,        # ~8 MiB actually used
        ),
        cost_estimate=cost,
    )(preds, tgt2d)

    # Final reduce of the tiny (grid*8, 128) partial table + mean over original N.
    return jnp.sum(partials) / jnp.float32(n)


def quantile_loss(inputs, targets, quantiles, **kwargs):
    """PyTorch-compatible signature: inputs (N, Q), targets (N,).

    The transpose below is an extra HBM pass over the predictions (layout
    plumbing only). In a fused pipeline, have the producer emit (Q, N) and
    call `quantile_loss_qn` directly to avoid it.
    """
    return quantile_loss_qn(jnp.transpose(inputs), targets, quantiles, **kwargs)


def _reference(inputs, targets, quantiles):
    """Pure-JAX reference mirroring the PyTorch module exactly."""
    losses = []
    for i, q in enumerate(quantiles):
        errors = targets - inputs[:, i]
        losses.append(jnp.maximum((q - 1.0) * errors, q * errors)[:, None])
    return jnp.concatenate(losses, axis=1).sum(axis=1).mean()


if __name__ == "__main__":
    key = jax.random.PRNGKey(0)
    k1, k2 = jax.random.split(key)

    # Small quantile-regression problem: B=2, 16x16 spatial -> N = 512 rows,
    # Q = 3 quantile predictions per row (matches the cultionet usage).
    B, H, W_sp = 2, 16, 16
    N = B * H * W_sp
    quantiles = (0.1, 0.5, 0.9)

    inputs = jax.random.normal(k1, (N, len(quantiles)), dtype=jnp.float32)
    targets = jax.random.normal(k2, (N,), dtype=jnp.float32)

    ref = jax.block_until_ready(_reference(inputs, targets, quantiles))

    # 1) PyTorch-layout API: inputs (N, Q).
    loss = jax.block_until_ready(quantile_loss(inputs, targets, quantiles))
    assert jnp.allclose(loss, ref, rtol=1e-5, atol=1e-5), (float(loss), float(ref))

    # 2) Preferred quantile-major (Q, N) layout: no wrapper transpose pass.
    loss_qn = jax.block_until_ready(
        quantile_loss_qn(jnp.transpose(inputs), targets, quantiles))
    assert jnp.allclose(loss_qn, ref, rtol=1e-5, atol=1e-5), (
        float(loss_qn), float(ref))

    # 3) Native-dtype streaming: bf16 predictions, upcast inside the kernel.
    inputs_bf16 = inputs.astype(jnp.bfloat16)
    ref_bf16 = jax.block_until_ready(
        _reference(inputs_bf16.astype(jnp.float32), targets, quantiles))
    loss_bf16 = jax.block_until_ready(
        quantile_loss(inputs_bf16, targets, quantiles))
    assert jnp.allclose(loss_bf16, ref_bf16, rtol=1e-5, atol=1e-5), (
        float(loss_bf16), float(ref_bf16))

    print("KERNEL_OK")
</pallas_src>

<mosaic_0001>
module attributes {stable_mosaic.version = 11 : i64} {
  func.func @_quantile_loss_kernel(%arg0: i32, %arg1: memref<3x8x128xf32, #tpu.memory_space<vmem>>, %arg2: memref<8x128xf32, #tpu.memory_space<vmem>>, %arg3: memref<8x128xf32, #tpu.memory_space<vmem>>) attributes {dimension_semantics = [#tpu.dimension_semantics<parallel>], iteration_bounds = array<i64: 1>, scalar_prefetch = 0 : i64, scratch_operands = 0 : i64, tpu.core_type = #tpu.core_type<tc>, window_params = [{transform_indices = @transform_0, window_bounds = array<i64: 3, 8, 128>}, {transform_indices = @transform_1, window_bounds = array<i64: 8, 128>}, {transform_indices = @transform_2, window_bounds = array<i64: 8, 128>}]} {
    %c0 = arith.constant 0 : index
    %c0_0 = arith.constant 0 : index
    %0 = vector.load %arg2[%c0, %c0_0] : memref<8x128xf32, #tpu.memory_space<vmem>>, vector<8x128xf32>
    %cst = arith.constant 0.000000e+00 : f32
    %1 = vector.broadcast %cst : f32 to vector<8x128xf32>
    %c0_1 = arith.constant 0 : index
    %c0_2 = arith.constant 0 : index
    %c0_3 = arith.constant 0 : index
    %2 = vector.load %arg1[%c0_1, %c0_2, %c0_3] : memref<3x8x128xf32, #tpu.memory_space<vmem>>, vector<1x8x128xf32>
    %3 = vector.shape_cast %2 : vector<1x8x128xf32> to vector<8x128xf32>
    %4 = arith.subf %0, %3 : vector<8x128xf32>
    %cst_4 = arith.constant -0.899999976 : f32
    %5 = vector.broadcast %cst_4 : f32 to vector<8x128xf32>
    %6 = arith.mulf %5, %4 : vector<8x128xf32>
    %cst_5 = arith.constant 1.000000e-01 : f32
    %7 = vector.broadcast %cst_5 : f32 to vector<8x128xf32>
    %8 = arith.mulf %7, %4 : vector<8x128xf32>
    %9 = arith.maximumf %6, %8 : vector<8x128xf32>
    %10 = arith.addf %1, %9 : vector<8x128xf32>
    %c1 = arith.constant 1 : index
    %c0_6 = arith.constant 0 : index
    %c0_7 = arith.constant 0 : index
    %11 = vector.load %arg1[%c1, %c0_6, %c0_7] : memref<3x8x128xf32, #tpu.memory_space<vmem>>, vector<1x8x128xf32>
    %12 = vector.shape_cast %11 : vector<1x8x128xf32> to vector<8x128xf32>
    %13 = arith.subf %0, %12 : vector<8x128xf32>
    %cst_8 = arith.constant -5.000000e-01 : f32
    %14 = vector.broadcast %cst_8 : f32 to vector<8x128xf32>
    %15 = arith.mulf %14, %13 : vector<8x128xf32>
    %cst_9 = arith.constant 5.000000e-01 : f32
    %16 = vector.broadcast %cst_9 : f32 to vector<8x128xf32>
    %17 = arith.mulf %16, %13 : vector<8x128xf32>
    %18 = arith.maximumf %15, %17 : vector<8x128xf32>
    %19 = arith.addf %10, %18 : vector<8x128xf32>
    %c2 = arith.constant 2 : index
    %c0_10 = arith.constant 0 : index
    %c0_11 = arith.constant 0 : index
    %20 = vector.load %arg1[%c2, %c0_10, %c0_11] : memref<3x8x128xf32, #tpu.memory_space<vmem>>, vector<1x8x128xf32>
    %21 = vector.shape_cast %20 : vector<1x8x128xf32> to vector<8x128xf32>
    %22 = arith.subf %0, %21 : vector<8x128xf32>
    %cst_12 = arith.constant -1.000000e-01 : f32
    %23 = vector.broadcast %cst_12 : f32 to vector<8x128xf32>
    %24 = arith.mulf %23, %22 : vector<8x128xf32>
    %cst_13 = arith.constant 0.899999976 : f32
    %25 = vector.broadcast %cst_13 : f32 to vector<8x128xf32>
    %26 = arith.mulf %25, %22 : vector<8x128xf32>
    %27 = arith.maximumf %24, %26 : vector<8x128xf32>
    %28 = arith.addf %19, %27 : vector<8x128xf32>
    %29 = vector.shape_cast %28 : vector<8x128xf32> to vector<1x8x128xf32>
    %cst_14 = arith.constant dense<0.000000e+00> : vector<8x128xf32>
    %30 = vector.multi_reduction <add>, %29, %cst_14 [0] : vector<1x8x128xf32> to vector<8x128xf32>
    %c0_15 = arith.constant 0 : index
    %c0_16 = arith.constant 0 : index
    %31 = vector.load %arg3[%c0_15, %c0_16] : memref<8x128xf32, #tpu.memory_space<vmem>>, vector<8x128xf32>
    tpu.vector_store %arg3[%c0_15, %c0_16], %30 {strides = array<i32>} : memref<8x128xf32, #tpu.memory_space<vmem>>, vector<8x128xf32>,
    return
  }
  func.func @transform_0(%arg0: i32) -> (i32, i32, i32) {
    %c0_i32 = arith.constant 0 : i32
    %c0_i32_0 = arith.constant 0 : i32
    %c0_i32_1 = arith.constant 0 : i32
    return %c0_i32, %arg0, %c0_i32_0 : i32, i32, i32
  }
  func.func @transform_1(%arg0: i32) -> (i32, i32) {
    %c0_i32 = arith.constant 0 : i32
    %c0_i32_0 = arith.constant 0 : i32
    return %arg0, %c0_i32 : i32, i32
  }
  func.func @transform_2(%arg0: i32) -> (i32, i32) {
    %c0_i32 = arith.constant 0 : i32
    %c0_i32_0 = arith.constant 0 : i32
    return %arg0, %c0_i32 : i32, i32
  }
}

</mosaic_0001>

<llo_original>
// kernel: tpu_custom_call.1
$region0: #{tpu_custom_call.1}
  #allocation0 [shape = 'u32[]', space=smem, size = 0x4, offset = 0x4, fixed_abs, tag = 'smem constant byte address 0x4 - core index']
  #allocation1 [shape = 'u32[144,128]{1,0:T(1,128)}', space=vmem, size = 0x12000, scoped, tag = 'internal scratch']
  %s0 = inlined_call_operand.hbm [shape: f32[3,8,128], index: 0, kind: input, shape index: {}]
  %s1 = inlined_call_operand.hbm [shape: f32[8,128], index: 1, kind: input, shape index: {}]
  %s2 = inlined_call_operand.hbm [shape: f32[8,128], index: 2, kind: output, shape index: {}]
  %s3 = sld [smem:[#allocation0]]
  $region26: #{tpu_custom_call.1} parent=0
    _
  %s5 = ssub.s32 1, %s3
  %s6 = scalar_select 0, %s5, %s3
  $region1: #{tpu_custom_call.1} parent=0
    #allocation2 [shape = 'u8[12288]{0}', space=vmem, size = 0x3000, scoped, tag = 'input window, operand 0, single buffered']
    #allocation3 [shape = 's32[1]{0}', space=sflag, size = 0x4, scoped, tag = 'scoped memory for tpu_custom_call.1']
    #allocation4 [shape = 's32[1]{0}', space=sflag, size = 0x4, scoped, tag = 'scoped memory for tpu_custom_call.1']
    #allocation5 [shape = 'u8[4096]{0}', space=vmem, size = 0x1000, scoped, tag = 'input window, operand 1, single buffered']
    #allocation6 [shape = 's32[1]{0}', space=sflag, size = 0x4, scoped, tag = 'scoped memory for tpu_custom_call.1']
    #allocation7 [shape = 'u8[4096]{0}', space=vmem, size = 0x1000, scoped, tag = 'output window, operand 0, single buffered']
    %7 = vsyncpa [#allocation3], 0
    %8 = vsyncpa [#allocation6], 0
    %9 = vsyncpa [#allocation4], 0
    // Predicated region
    $region2: #{tpu_custom_call.1} parent=1 // pred_check
      _
    $region3: #{tpu_custom_call.1} parent=1 // pred_check_branch
      %11 = sbr.rel (0) target = $region5
    $region4: #{tpu_custom_call.1} parent=1 // pred_region
      %s13 = ssub.s32 384, 384
      %14 = vsyncadd [#allocation3], %s13
      %s15 = sshll.u32 [#allocation2], 4
      %s16 = int_to_ptr.vmem [resolvable:$true] %s15
      %21 = dma.hbm_to_vmem [thread:$0]  %s0, 384, %s16, [#allocation3], 128, 128, 8
    $region5: #{tpu_custom_call.1} parent=1 // pred_fallthru
      _
    // Predicated region
    $region6: #{tpu_custom_call.1} parent=1 // pred_check
      _
    $region7: #{tpu_custom_call.1} parent=1 // pred_check_branch
      %23 = sbr.rel (0) target = $region9
    $region8: #{tpu_custom_call.1} parent=1 // pred_region
      %s25 = ssub.s32 128, 128
      %26 = vsyncadd [#allocation6], %s25
      %s28 = sshll.u32 [#allocation5], 4
      %s29 = int_to_ptr.vmem [resolvable:$true] %s28
      %31 = dma.hbm_to_vmem [thread:$0]  %s1, 128, %s29, [#allocation6]
    $region9: #{tpu_custom_call.1} parent=1 // pred_fallthru
      _
    // Predicated region
    $region10: #{tpu_custom_call.1} parent=1 // pred_check
      _
    $region11: #{tpu_custom_call.1} parent=1 // pred_check_branch
      %33 = sbr.rel (0) target = $region13
    $region12: #{tpu_custom_call.1} parent=1 // pred_region
      %34 = dma.done [#allocation3], 384
    $region13: #{tpu_custom_call.1} parent=1 // pred_fallthru
      _
    // Predicated region
    $region14: #{tpu_custom_call.1} parent=1 // pred_check
      _
    $region15: #{tpu_custom_call.1} parent=1 // pred_check_branch
      %36 = sbr.rel (0) target = $region17
    $region16: #{tpu_custom_call.1} parent=1 // pred_region
      %37 = dma.done [#allocation6], 128
    $region17: #{tpu_custom_call.1} parent=1 // pred_fallthru
      _
    %v38 = vld [vmem:[#allocation5] sm:$0xff]
    %v39 = vld [vmem:[#allocation2] sm:$0xff]
    %v40 = vsub.f32 %v38, %v39
    %v41 = vmul.f32 %v40, -0.9
    %v42 = vmul.f32 %v40, 0.1
    %v43 = vmax.f32 %v41, %v42
    %v44 = vadd.f32 %v43, 0.0
    %s45 = scalar_lea.vmem [#allocation2], 8
    %v46 = vld [vmem:[%s45] sm:$0xff]
    %v47 = vsub.f32 %v38, %v46
    %v48 = vmul.f32 %v47, -0.5
    %v49 = vmul.f32 %v47, 0.5
    %v50 = vmax.f32 %v48, %v49
    %v51 = vadd.f32 %v44, %v50
    %s52 = scalar_lea.vmem [#allocation2], 16
    %v53 = vld [vmem:[%s52] sm:$0xff]
    %v54 = vsub.f32 %v38, %v53
    %v55 = vmul.f32 %v54, -0.1
    %v56 = vmul.f32 %v54, 0.9
    %v57 = vmax.f32 %v55, %v56
    %v58 = vadd.f32 %v51, %v57
    %v59 = vadd.f32 %v58, 0.0
    %60 = vst [vmem:[#allocation7] sm:$0xff] %v59
    // Predicated region
    $region18: #{tpu_custom_call.1} parent=1 // pred_check
      _
    $region19: #{tpu_custom_call.1} parent=1 // pred_check_branch
      %62 = sbr.rel (0) target = $region21
    $region20: #{tpu_custom_call.1} parent=1 // pred_region
      %s64 = ssub.s32 128, 128
      %65 = vsyncadd [#allocation4], %s64
      %s67 = sshll.u32 [#allocation7], 4
      %s68 = int_to_ptr.vmem [resolvable:$true] %s67
      %70 = dma.vmem_to_hbm [thread:$0]  %s68, 128, %s2, [#allocation4]
    $region21: #{tpu_custom_call.1} parent=1 // pred_fallthru
      _
    // Predicated region
    $region22: #{tpu_custom_call.1} parent=1 // pred_check
      _
    $region23: #{tpu_custom_call.1} parent=1 // pred_check_branch
      %72 = sbr.rel (0) target = $region25
    $region24: #{tpu_custom_call.1} parent=1 // pred_region
      %73 = dma.done [#allocation4], 128
    $region25: #{tpu_custom_call.1} parent=1 // pred_fallthru
      _
    %74 = vsyncpa [#allocation3], 1
    %75 = vsyncpa [#allocation6], 1
    %76 = vsyncpa [#allocation4], 1

</llo_original>
